<compile_context>
chip_gen: v7x
topology: tpu7x:2x2x1
jax: 0.10.0
libtpu: 0.0.40
codegen_flags: <defaults>
</compile_context>

<pallas_src>
import functools

import jax
import jax.numpy as jnp
from jax.experimental import pallas as pl
from jax.experimental.pallas import tpu as pltpu

_MIB = 1024 * 1024


def _tpu_vmem_capacity_bytes():
    """Best-effort VMEM capacity; falls back to the v7x per-TC minimum."""
    try:
        cap = int(getattr(pltpu.get_tpu_info(), "vmem_capacity_bytes", 0))
        if cap > 0:
            return cap
    except Exception:
        pass
    return 64 * _MIB


def _num_tensorcores():
    """Best-effort TensorCores-per-chip (2 on v7x, 1 on v5e/v6e)."""
    try:
        info = pltpu.get_tpu_info()
        for name in ("num_cores", "num_tensorcores", "tensorcores_per_chip",
                     "cores_per_chip", "core_count"):
            v = getattr(info, name, None)
            if v is not None and int(v) in (1, 2):
                return int(v)
    except Exception:
        pass
    try:
        v = getattr(jax.devices()[0], "num_cores", None)
        if v is not None and int(v) in (1, 2):
            return int(v)
    except Exception:
        pass
    return 1


def _channel_attention_kernel(x_ref, w1t_ref, w2t_ref, o_ref,
                              sum_acc, max_acc, *,
                              hw_true, thw, needs_mask):
    # x_ref:   (TB, C, THW)   one batch tile x one spatial tile
    # w1t_ref: (C,  Crp)      fc1 weight, transposed, hidden dim zero-padded
    # w2t_ref: (Crp, Cp)      fc2 weight, transposed, both dims zero-padded
    # o_ref:   (TB, Cp) or (TB, 1, Cp)
    # sum_acc: (TB, C) f32    running spatial sum   (scratch, lives across s)
    # max_acc: (TB, C) f32    running spatial max   (scratch)
    s = pl.program_id(1)
    n_hw = pl.num_programs(1)

    @pl.when(s == 0)
    def _init():
        sum_acc[...] = jnp.zeros_like(sum_acc)
        max_acc[...] = jnp.full_like(max_acc, -jnp.inf)

    x = x_ref[...].astype(jnp.float32)                       # (TB, C, THW)

    def _accumulate(xs, xm):
        sum_acc[...] = sum_acc[...] + jnp.sum(xs, axis=2)
        max_acc[...] = jnp.maximum(max_acc[...], jnp.max(xm, axis=2))

    if needs_mask:
        # Only the last spatial tile is ragged; keep full tiles unmasked.
        @pl.when(s < n_hw - 1)
        def _full():
            _accumulate(x, x)

        @pl.when(s == n_hw - 1)
        def _ragged():
            lane = jax.lax.broadcasted_iota(jnp.int32, (1, 1, thw), 2)
            valid = (s * thw + lane) < hw_true
            _accumulate(jnp.where(valid, x, 0.0),
                        jnp.where(valid, x, -jnp.inf))
    else:
        _accumulate(x, x)

    @pl.when(s == n_hw - 1)
    def _finalize():
        tb = sum_acc.shape[0]
        w1t = w1t_ref[...]                                    # (C, Crp) f32
        w2t = w2t_ref[...]                                    # (Crp, Cp) f32
        avg_p = sum_acc[...] * (1.0 / float(hw_true))         # (TB, C)
        max_p = max_acc[...]                                  # (TB, C)
        # One fused MLP pass over both pooled branches.
        p = jnp.concatenate([avg_p, max_p], axis=0)           # (2*TB, C)
        h = jnp.maximum(
            jnp.dot(p, w1t, preferred_element_type=jnp.float32), 0.0)
        y = jnp.dot(h, w2t, preferred_element_type=jnp.float32)  # (2*TB, Cp)
        out = jax.nn.sigmoid(y[:tb] + y[tb:])                 # (TB, Cp)
        o_ref[...] = out.reshape(o_ref.shape).astype(o_ref.dtype)


def channel_attention(x, w1, w2, *, x_block_budget_bytes=None):
    """x: (N, C, H, W).  w1: (Cr, C) fc1 weight.  w2: (C, Cr) fc2 weight.
    Returns (N, C, 1, 1) — same as the PyTorch module."""
    N, C, H, W = x.shape
    Cr = w1.shape[0]
    HW = H * W
    assert HW > 0, "empty spatial extent would propagate -inf through max-pool"
    itemsize = jnp.dtype(x.dtype).itemsize

    # ---- per-generation sizing ------------------------------------------
    vmem_cap = _tpu_vmem_capacity_bytes()
    if x_block_budget_bytes is None:
        # ~8 MiB on v7x (64 MiB VMEM/TC), ~16 MiB on v5e/v6e (128 MiB VMEM).
        x_block_budget_bytes = int(min(16 * _MIB, max(4 * _MIB, vmem_cap // 8)))
    budget = int(x_block_budget_bytes)
    n_cores = _num_tensorcores()

    # ---- tile selection (no wrapper-side padding of x) --------------------
    per_sample = C * HW * itemsize
    if per_sample <= budget:
        thw = HW                               # whole spatial extent per step
    else:
        # Spatial tiling: multiple of 128 lanes per step; ragged tail masked
        # in-kernel.  Never materializes a padded copy of x in HBM.
        thw = max(128, (budget // (C * itemsize)) // 128 * 128)
        thw = min(thw, HW)
    n_hw = -(-HW // thw)
    needs_mask = (HW % thw) != 0

    tb = max(1, budget // (C * thw * itemsize))
    tb = min(tb, N, 512)
    if n_cores >= 2 and N >= 2:
        tb = min(tb, -(-N // 2))               # >=2 batch tiles on v7x only
    if tb < N and tb >= 8:
        tb = (tb // 8) * 8                     # dense (8,128)-aligned stores
    nbt = -(-N // tb)

    cp = -(-C // 128) * 128                    # lane-dense output width
    crp = -(-Cr // 128) * 128                  # padded hidden width

    # 2-D lane-dense output whenever the block satisfies the (8,128) rule;
    # otherwise fall back to (N, 1, cp) (middle block dim == full dim 1).
    out_is_2d = (tb == N) or (tb % 8 == 0)

    # ---- inputs / weights --------------------------------------------------
    x_flat = x.reshape(N, C, HW)               # view; no HBM duplication

    # Zero-padded, pre-transposed 1x1-conv weights.  Padding is exact:
    # relu(0) = 0 and zero rows of w2t contribute nothing; padded output
    # columns are sliced off below.
    w1t = jnp.zeros((C, crp), jnp.float32).at[:, :Cr].set(w1.T.astype(jnp.float32))
    w2t = jnp.zeros((crp, cp), jnp.float32).at[:Cr, :C].set(w2.T.astype(jnp.float32))

    kernel = functools.partial(_channel_attention_kernel,
                               hw_true=HW, thw=thw, needs_mask=needs_mask)

    # ---- explicit VMEM limit so larger blocks fit on every generation -----
    x_block_bytes = tb * C * thw * itemsize
    w_bytes = (C * crp + crp * cp) * 4
    o_block_bytes = tb * cp * itemsize
    scratch_bytes = 2 * tb * C * 4
    vmem_needed = (2 * x_block_bytes            # double-buffered x blocks
                   + 2 * w_bytes                # weights (default buffering)
                   + 2 * o_block_bytes          # output blocks
                   + scratch_bytes)
    vmem_limit = max(vmem_needed * 5 // 4 + 2 * _MIB, 32 * _MIB)
    vmem_limit = int(min(vmem_limit, max(32 * _MIB, vmem_cap * 3 // 4)))

    cost = pl.CostEstimate(
        flops=int(N * (2 * C * HW + 8 * C * Cr)),
        transcendentals=int(N * C),
        bytes_accessed=int(N * C * HW * itemsize + w_bytes + N * cp * itemsize),
    )

    if out_is_2d:
        out_shape = jax.ShapeDtypeStruct((N, cp), x.dtype)
        out_spec = pl.BlockSpec((tb, cp), lambda b, s: (b, 0))
    else:
        out_shape = jax.ShapeDtypeStruct((N, 1, cp), x.dtype)
        out_spec = pl.BlockSpec((tb, 1, cp), lambda b, s: (b, 0, 0))

    out = pl.pallas_call(
        kernel,
        out_shape=out_shape,
        grid_spec=pltpu.PrefetchScalarGridSpec(
            num_scalar_prefetch=0,
            grid=(nbt, n_hw),                   # (batch tiles, spatial tiles)
            in_specs=[
                pl.BlockSpec((tb, C, thw), lambda b, s: (b, 0, s)),
                pl.BlockSpec((C, crp), lambda b, s: (0, 0)),   # fetched once
                pl.BlockSpec((crp, cp), lambda b, s: (0, 0)),  # fetched once
            ],
            out_specs=out_spec,
            scratch_shapes=[
                pltpu.VMEM((tb, C), jnp.float32),   # running spatial sum
                pltpu.VMEM((tb, C), jnp.float32),   # running spatial max
            ],
        ),
        compiler_params=pltpu.CompilerParams(
            dimension_semantics=("parallel", "arbitrary"),
            vmem_limit_bytes=vmem_limit),
        cost_estimate=cost,
    )(x_flat, w1t, w2t)

    return out.reshape(N, cp)[:, :C].reshape(N, C, 1, 1)


def _reference(x, w1, w2):
    # Pure-JAX reference mirroring the PyTorch forward.
    avg_p = jnp.mean(x, axis=(2, 3))            # (N, C)
    max_p = jnp.max(x, axis=(2, 3))             # (N, C)

    def mlp(p):
        h = jnp.maximum(p @ w1.T, 0.0)          # (N, Cr)
        return h @ w2.T                         # (N, C)

    out = jax.nn.sigmoid(mlp(avg_p) + mlp(max_p))
    return out[:, :, None, None]


if __name__ == "__main__":
    key = jax.random.PRNGKey(0)
    configs = [
        # (N, C, H, W, ratio, x_block_budget_bytes)
        (2, 32, 16, 16, 8, None),        # everything in one block (fast path)
        (3, 16, 20, 20, 8, 16 * 1024),   # spatial tiling + ragged last tile
        (5, 16, 8, 8, 8, 8 * 1024),      # ragged batch-edge block
    ]
    for idx, (N, C, H, W, ratio, budget) in enumerate(configs):
        key, kx, k1, k2 = jax.random.split(key, 4)
        Cr = C // ratio
        x = jax.random.normal(kx, (N, C, H, W), dtype=jnp.float32)
        # Conv2d(in, out, 1, bias=False) weights -> (out, in) matrices.
        w1 = jax.random.normal(k1, (Cr, C), dtype=jnp.float32) * 0.1   # fc1
        w2 = jax.random.normal(k2, (C, Cr), dtype=jnp.float32) * 0.1   # fc2

        kwargs = {} if budget is None else {"x_block_budget_bytes": budget}
        y = channel_attention(x, w1, w2, **kwargs)
        jax.block_until_ready(y)

        y_ref = _reference(x, w1, w2)
        assert y.shape == (N, C, 1, 1)
        assert jnp.allclose(y, y_ref, atol=1e-5, rtol=1e-5), f"mismatch in config {idx}"

    print("KERNEL_OK")
</pallas_src>

<mosaic_0001>
module attributes {stable_mosaic.version = 11 : i64} {
  func.func @_channel_attention_kernel(%arg0: i32, %arg1: i32, %arg2: memref<2x32x256xf32, #tpu.memory_space<vmem>>, %arg3: memref<32x128xf32, #tpu.memory_space<vmem>>, %arg4: memref<128x128xf32, #tpu.memory_space<vmem>>, %arg5: memref<2x128xf32, #tpu.memory_space<vmem>>, %arg6: memref<2x32xf32, #tpu.memory_space<vmem>>, %arg7: memref<2x32xf32, #tpu.memory_space<vmem>>) attributes {dimension_semantics = [#tpu.dimension_semantics<parallel>, #tpu.dimension_semantics<arbitrary>], iteration_bounds = array<i64: 1, 1>, scalar_prefetch = 0 : i64, scratch_operands = 2 : i64, tpu.core_type = #tpu.core_type<tc>, window_params = [{transform_indices = @transform_0, window_bounds = array<i64: 2, 32, 256>}, {pipeline_mode = #tpu.pipeline_mode<synchronous>, transform_indices = @transform_1, window_bounds = array<i64: 32, 128>}, {pipeline_mode = #tpu.pipeline_mode<synchronous>, transform_indices = @transform_2, window_bounds = array<i64: 128, 128>}, {transform_indices = @transform_3, window_bounds = array<i64: 2, 128>}]} {
    %c0_i32 = arith.constant 0 : i32
    %0 = arith.cmpi eq, %arg1, %c0_i32 : i32
    %1 = arith.extui %0 : i1 to i32
    %c0_i32_0 = arith.constant 0 : i32
    %2 = arith.cmpi ne, %1, %c0_i32_0 : i32
    scf.if %2 {
      %cst_14 = arith.constant 0.000000e+00 : f32
      %15 = vector.broadcast %cst_14 : f32 to vector<2x32xf32>
      %c0_15 = arith.constant 0 : index
      %c0_16 = arith.constant 0 : index
      %16 = vector.load %arg6[%c0_15, %c0_16] : memref<2x32xf32, #tpu.memory_space<vmem>>, vector<2x32xf32>
      tpu.vector_store %arg6[%c0_15, %c0_16], %15 {strides = array<i32>} : memref<2x32xf32, #tpu.memory_space<vmem>>, vector<2x32xf32>,
      %cst_17 = arith.constant 0xFF800000 : f32
      %17 = vector.broadcast %cst_17 : f32 to vector<2x32xf32>
      %c0_18 = arith.constant 0 : index
      %c0_19 = arith.constant 0 : index
      %18 = vector.load %arg7[%c0_18, %c0_19] : memref<2x32xf32, #tpu.memory_space<vmem>>, vector<2x32xf32>
      tpu.vector_store %arg7[%c0_18, %c0_19], %17 {strides = array<i32>} : memref<2x32xf32, #tpu.memory_space<vmem>>, vector<2x32xf32>,
    } else {
    }
    %c0 = arith.constant 0 : index
    %c0_1 = arith.constant 0 : index
    %c0_2 = arith.constant 0 : index
    %3 = vector.load %arg2[%c0, %c0_1, %c0_2] : memref<2x32x256xf32, #tpu.memory_space<vmem>>, vector<2x32x256xf32>
    %c0_3 = arith.constant 0 : index
    %c0_4 = arith.constant 0 : index
    %4 = vector.load %arg6[%c0_3, %c0_4] : memref<2x32xf32, #tpu.memory_space<vmem>>, vector<2x32xf32>
    %cst = arith.constant dense<0.000000e+00> : vector<2x32xf32>
    %5 = vector.multi_reduction <add>, %3, %cst [2] : vector<2x32x256xf32> to vector<2x32xf32>
    %6 = arith.addf %4, %5 : vector<2x32xf32>
    %c0_5 = arith.constant 0 : index
    %c0_6 = arith.constant 0 : index
    %7 = vector.load %arg6[%c0_5, %c0_6] : memref<2x32xf32, #tpu.memory_space<vmem>>, vector<2x32xf32>
    tpu.vector_store %arg6[%c0_5, %c0_6], %6 {strides = array<i32>} : memref<2x32xf32, #tpu.memory_space<vmem>>, vector<2x32xf32>,
    %c0_7 = arith.constant 0 : index
    %c0_8 = arith.constant 0 : index
    %8 = vector.load %arg7[%c0_7, %c0_8] : memref<2x32xf32, #tpu.memory_space<vmem>>, vector<2x32xf32>
    %cst_9 = arith.constant dense<0xFF800000> : vector<2x32xf32>
    %9 = vector.multi_reduction <maximumf>, %3, %cst_9 [2] : vector<2x32x256xf32> to vector<2x32xf32>
    %10 = arith.maximumf %8, %9 : vector<2x32xf32>
    %c0_10 = arith.constant 0 : index
    %c0_11 = arith.constant 0 : index
    %11 = vector.load %arg7[%c0_10, %c0_11] : memref<2x32xf32, #tpu.memory_space<vmem>>, vector<2x32xf32>
    tpu.vector_store %arg7[%c0_10, %c0_11], %10 {strides = array<i32>} : memref<2x32xf32, #tpu.memory_space<vmem>>, vector<2x32xf32>,
    %c0_i32_12 = arith.constant 0 : i32
    %12 = arith.cmpi eq, %arg1, %c0_i32_12 : i32
    %13 = arith.extui %12 : i1 to i32
    %c0_i32_13 = arith.constant 0 : i32
    %14 = arith.cmpi ne, %13, %c0_i32_13 : i32
    scf.if %14 {
      %c0_14 = arith.constant 0 : index
      %c0_15 = arith.constant 0 : index
      %15 = vector.load %arg3[%c0_14, %c0_15] : memref<32x128xf32, #tpu.memory_space<vmem>>, vector<32x128xf32>
      %c0_16 = arith.constant 0 : index
      %c0_17 = arith.constant 0 : index
      %16 = vector.load %arg4[%c0_16, %c0_17] : memref<128x128xf32, #tpu.memory_space<vmem>>, vector<128x128xf32>
      %c0_18 = arith.constant 0 : index
      %c0_19 = arith.constant 0 : index
      %17 = vector.load %arg6[%c0_18, %c0_19] : memref<2x32xf32, #tpu.memory_space<vmem>>, vector<2x32xf32>
      %cst_20 = arith.constant 3.906250e-03 : f32
      %18 = vector.broadcast %cst_20 : f32 to vector<2x32xf32>
      %19 = arith.mulf %17, %18 : vector<2x32xf32>
      %c0_21 = arith.constant 0 : index
      %c0_22 = arith.constant 0 : index
      %20 = vector.load %arg7[%c0_21, %c0_22] : memref<2x32xf32, #tpu.memory_space<vmem>>, vector<2x32xf32>
      %21 = tpu.concatenate %19, %20 in 0 : vector<2x32xf32>, vector<2x32xf32> -> vector<4x32xf32>
      %cst_23 = arith.constant dense<0.000000e+00> : vector<4x128xf32>
      %22 = tpu.matmul %21, %15, %cst_23 {dimension_numbers = #tpu.dot_dimension_numbers<[1], [0], [0], [1], [0, 0, 1, 1], [], []>} : vector<4x32xf32>, vector<32x128xf32>, vector<4x128xf32> -> vector<4x128xf32>
      %cst_24 = arith.constant 0.000000e+00 : f32
      %23 = vector.broadcast %cst_24 : f32 to vector<4x128xf32>
      %24 = arith.maximumf %22, %23 : vector<4x128xf32>
      %cst_25 = arith.constant dense<0.000000e+00> : vector<4x128xf32>
      %25 = tpu.matmul %24, %16, %cst_25 {dimension_numbers = #tpu.dot_dimension_numbers<[1], [0], [0], [1], [0, 0, 1, 1], [], []>} : vector<4x128xf32>, vector<128x128xf32>, vector<4x128xf32> -> vector<4x128xf32>
      %26 = vector.extract_strided_slice %25 {offsets = [0, 0], sizes = [2, 128], strides = [1, 1]} : vector<4x128xf32> to vector<2x128xf32>
      %27 = vector.extract_strided_slice %25 {offsets = [2, 0], sizes = [2, 128], strides = [1, 1]} : vector<4x128xf32> to vector<2x128xf32>
      %28 = arith.addf %26, %27 : vector<2x128xf32>
      %29 = arith.negf %28 : vector<2x128xf32>
      %30 = math.exp %29 : vector<2x128xf32>
      %cst_26 = arith.constant 1.000000e+00 : f32
      %31 = vector.broadcast %cst_26 : f32 to vector<2x128xf32>
      %32 = arith.addf %31, %30 : vector<2x128xf32>
      %33 = arith.divf %31, %32 : vector<2x128xf32>
      %c0_27 = arith.constant 0 : index
      %c0_28 = arith.constant 0 : index
      %34 = vector.load %arg5[%c0_27, %c0_28] : memref<2x128xf32, #tpu.memory_space<vmem>>, vector<2x128xf32>
      tpu.vector_store %arg5[%c0_27, %c0_28], %33 {strides = array<i32>} : memref<2x128xf32, #tpu.memory_space<vmem>>, vector<2x128xf32>,
    } else {
    }
    return
  }
  func.func @transform_0(%arg0: i32, %arg1: i32) -> (i32, i32, i32) {
    %c0_i32 = arith.constant 0 : i32
    %c0_i32_0 = arith.constant 0 : i32
    return %arg0, %c0_i32, %arg1 : i32, i32, i32
  }
  func.func @transform_1(%arg0: i32, %arg1: i32) -> (i32, i32) {
    %c0_i32 = arith.constant 0 : i32
    %c0_i32_0 = arith.constant 0 : i32
    %c0_i32_1 = arith.constant 0 : i32
    return %c0_i32, %c0_i32_0 : i32, i32
  }
  func.func @transform_2(%arg0: i32, %arg1: i32) -> (i32, i32) {
    %c0_i32 = arith.constant 0 : i32
    %c0_i32_0 = arith.constant 0 : i32
    %c0_i32_1 = arith.constant 0 : i32
    return %c0_i32, %c0_i32_0 : i32, i32
  }
  func.func @transform_3(%arg0: i32, %arg1: i32) -> (i32, i32) {
    %c0_i32 = arith.constant 0 : i32
    %c0_i32_0 = arith.constant 0 : i32
    return %arg0, %c0_i32 : i32, i32
  }
}

</mosaic_0001>

<llo_original>
// kernel: tpu_custom_call.1
$region0: #{tpu_custom_call.1}
  #allocation0 [shape = 'u32[]', space=smem, size = 0x4, offset = 0x4, fixed_abs, tag = 'smem constant byte address 0x4 - core index']
  #allocation1 [shape = 'u32[144,128]{1,0:T(1,128)}', space=vmem, size = 0x12000, scoped, tag = 'internal scratch']
  #allocation2 [shape = 'f32[2,32]{1,0:T(2,128)}', space=vmem, size = 0x400, scoped, tag = 'scratch operand']
  #allocation3 [shape = 'f32[2,32]{1,0:T(2,128)}', space=vmem, size = 0x400, scoped, tag = 'scratch operand']
  %s0 = inlined_call_operand.hbm [shape: f32[2,32,256], index: 0, kind: input, shape index: {}]
  %s1 = inlined_call_operand.hbm [shape: f32[32,128], index: 1, kind: input, shape index: {}]
  %s2 = inlined_call_operand.hbm [shape: f32[128,128], index: 2, kind: input, shape index: {}]
  %s3 = inlined_call_operand.hbm [shape: f32[2,128], index: 3, kind: output, shape index: {}]
  %s4 = sld [smem:[#allocation0]]
  $region42: #{tpu_custom_call.1} parent=0
    _
  %s6 = ssub.s32 1, %s4
  %s7 = scalar_select 0, %s6, %s4
  $region1: #{tpu_custom_call.1} parent=0
    #allocation4 [shape = 'u8[65536]{0}', space=vmem, size = 0x10000, scoped, tag = 'input window, operand 0, single buffered']
    #allocation5 [shape = 's32[1]{0}', space=sflag, size = 0x4, scoped, tag = 'scoped memory for tpu_custom_call.1']
    #allocation6 [shape = 's32[1]{0}', space=sflag, size = 0x4, scoped, tag = 'scoped memory for tpu_custom_call.1']
    #allocation7 [shape = 'u8[16384]{0}', space=vmem, size = 0x4000, scoped, tag = 'input window, operand 1, single buffered']
    #allocation8 [shape = 's32[1]{0}', space=sflag, size = 0x4, scoped, tag = 'scoped memory for tpu_custom_call.1']
    #allocation9 [shape = 'u8[65536]{0}', space=vmem, size = 0x10000, scoped, tag = 'input window, operand 2, single buffered']
    #allocation10 [shape = 'u8[1024]{0}', space=vmem, size = 0x400, scoped, tag = 'output window, operand 0, single buffered']
    %8 = vsyncpa [#allocation5], 0
    %9 = vsyncpa [#allocation8], 0
    %10 = vsyncpa [#allocation6], 0
    // Predicated region
    $region2: #{tpu_custom_call.1} parent=1 // pred_check
      _
    $region3: #{tpu_custom_call.1} parent=1 // pred_check_branch
      %12 = sbr.rel (0) target = $region5
    $region4: #{tpu_custom_call.1} parent=1 // pred_region
      %s14 = ssub.s32 2048, 2048
      %15 = vsyncadd [#allocation5], %s14
      %s16 = sshll.u32 [#allocation4], 4
      %s17 = int_to_ptr.vmem [resolvable:$true] %s16
      %22 = dma.hbm_to_vmem [thread:$0]  %s0, 2048, %s17, [#allocation5], 256, 256, 16
    $region5: #{tpu_custom_call.1} parent=1 // pred_fallthru
      _
    // Predicated region
    $region6: #{tpu_custom_call.1} parent=1 // pred_check
      _
    $region7: #{tpu_custom_call.1} parent=1 // pred_check_branch
      %24 = sbr.rel (0) target = $region9
    $region8: #{tpu_custom_call.1} parent=1 // pred_region
      %s26 = ssub.s32 512, 512
      %27 = vsyncadd [#allocation8], %s26
      %s28 = sshll.u32 [#allocation7], 4
      %s29 = int_to_ptr.vmem [resolvable:$true] %s28
      %34 = dma.hbm_to_vmem [thread:$0]  %s1, 512, %s29, [#allocation8], 128, 128, 8
    $region9: #{tpu_custom_call.1} parent=1 // pred_fallthru
      _
    // Predicated region
    $region10: #{tpu_custom_call.1} parent=1 // pred_check
      _
    $region11: #{tpu_custom_call.1} parent=1 // pred_check_branch
      %36 = sbr.rel (0) target = $region13
    $region12: #{tpu_custom_call.1} parent=1 // pred_region
      %s38 = ssub.s32 2048, 2048
      %39 = vsyncadd [#allocation8], %s38
      %s40 = sshll.u32 [#allocation9], 4
      %s41 = int_to_ptr.vmem [resolvable:$true] %s40
      %46 = dma.hbm_to_vmem [thread:$0]  %s2, 2048, %s41, [#allocation8], 128, 128, 8
    $region13: #{tpu_custom_call.1} parent=1 // pred_fallthru
      _
    // Predicated region
    $region14: #{tpu_custom_call.1} parent=1 // pred_check
      _
    $region15: #{tpu_custom_call.1} parent=1 // pred_check_branch
      %48 = sbr.rel (0) target = $region17
    $region16: #{tpu_custom_call.1} parent=1 // pred_region
      %49 = dma.done [#allocation5], 2048
    $region17: #{tpu_custom_call.1} parent=1 // pred_fallthru
      _
    // Predicated region
    $region18: #{tpu_custom_call.1} parent=1 // pred_check
      _
    $region19: #{tpu_custom_call.1} parent=1 // pred_check_branch
      %51 = sbr.rel (0) target = $region21
    $region20: #{tpu_custom_call.1} parent=1 // pred_region
      %52 = dma.done [#allocation8], 512
    $region21: #{tpu_custom_call.1} parent=1 // pred_fallthru
      _
    // Predicated region
    $region22: #{tpu_custom_call.1} parent=1 // pred_check
      _
    $region23: #{tpu_custom_call.1} parent=1 // pred_check_branch
      %54 = sbr.rel (0) target = $region25
    $region24: #{tpu_custom_call.1} parent=1 // pred_region
      %55 = dma.done [#allocation8], 2048
    $region25: #{tpu_custom_call.1} parent=1 // pred_fallthru
      _
    %p56 = scmp.eq.s32.totalorder 0, 0
    // Predicated region
    $region26: #{tpu_custom_call.1} parent=1 // pred_check
      %p57 = pneg %p56
    $region27: #{tpu_custom_call.1} parent=1 // pred_check_branch
      %59 = sbr.rel (%p57) target = $region29
    $region28: #{tpu_custom_call.1} parent=1 // pred_region
      %vm60 = vcmask 254976
      %61 = vst.msk [vmem:[#allocation2] sm:$0x3] %vm60, 0.0
      %62 = vst.msk [vmem:[#allocation3] sm:$0x3] %vm60, -inf
    $region29: #{tpu_custom_call.1} parent=1 // pred_fallthru
      _
    %v63 = vld [vmem:[#allocation4] sm:$0xff]
    %v64 = vld [vmem:[#allocation4 + $0x8] sm:$0xff]
    %v65 = vld [vmem:[#allocation4 + $0x10] sm:$0xff]
    %v66 = vld [vmem:[#allocation4 + $0x18] sm:$0xff]
    %v67 = vld [vmem:[#allocation4 + $0x20] sm:$0xff]
    %v68 = vld [vmem:[#allocation4 + $0x28] sm:$0xff]
    %v69 = vld [vmem:[#allocation4 + $0x30] sm:$0xff]
    %v70 = vld [vmem:[#allocation4 + $0x38] sm:$0xff]
    %v71 = vld [vmem:[#allocation4 + $0x40] sm:$0xff]
    %v72 = vld [vmem:[#allocation4 + $0x48] sm:$0xff]
    %v73 = vld [vmem:[#allocation4 + $0x50] sm:$0xff]
    %v74 = vld [vmem:[#allocation4 + $0x58] sm:$0xff]
    %v75 = vld [vmem:[#allocation4 + $0x60] sm:$0xff]
    %v76 = vld [vmem:[#allocation4 + $0x68] sm:$0xff]
    %v77 = vld [vmem:[#allocation4 + $0x70] sm:$0xff]
    %v78 = vld [vmem:[#allocation4 + $0x78] sm:$0xff]
    %v79 = vld [vmem:[#allocation2] sm:$0x3]
    %v80 = vadd.f32 %v63, %v64
    %81 = vadd.xlane.f32.xlu0 %v80
    %v82 = vpop.xlane.xlu0 %81
    %v83 = vadd.f32 %v65, %v66
    %84 = vadd.xlane.f32.xlu0 %v83
    %v85 = vpop.xlane.xlu0 %84
    %v86 = vadd.f32 %v67, %v68
    %87 = vadd.xlane.f32.xlu0 %v86
    %v88 = vpop.xlane.xlu0 %87
    %v89 = vadd.f32 %v69, %v70
    %90 = vadd.xlane.f32.xlu0 %v89
    %v91 = vpop.xlane.xlu0 %90
    %v92 = vadd.f32 %v71, %v72
    %93 = vadd.xlane.f32.xlu0 %v92
    %v94 = vpop.xlane.xlu0 %93
    %v95 = vadd.f32 %v73, %v74
    %96 = vadd.xlane.f32.xlu0 %v95
    %v97 = vpop.xlane.xlu0 %96
    %v98 = vadd.f32 %v75, %v76
    %99 = vadd.xlane.f32.xlu0 %v98
    %v100 = vpop.xlane.xlu0 %99
    %v101 = vadd.f32 %v77, %v78
    %102 = vadd.xlane.f32.xlu0 %v101
    %v103 = vpop.xlane.xlu0 %102
    %v112 = vlaneseq
    %v113 = vand.u32 %v112, 127
    %v114 = vlaneseq
    %v115 = vshrl.u32 %v114, 7
    %v116 = vsub.s32 %v113, %v115
    %v117 = vrot.slane %v82, %v116
    %v118 = vadd.s32 %v113, 4294967288
    %v119 = vlaneseq
    %v120 = vshrl.u32 %v119, 7
    %v121 = vsub.s32 %v118, %v120
    %v122 = vrot.slane %v85, %v121
    %vm123 = vcmask 130112
    %v124 = vsel %vm123, %v122, %v117
    %v125 = vadd.s32 %v113, 4294967280
    %v126 = vlaneseq
    %v127 = vshrl.u32 %v126, 7
    %v128 = vsub.s32 %v125, %v127
    %v129 = vrot.slane %v88, %v128
    %vm130 = vcmask 195712
    %v131 = vsel %vm130, %v129, %v124
    %v132 = vadd.s32 %v113, 4294967272
    %v133 = vlaneseq
    %v134 = vshrl.u32 %v133, 7
    %v135 = vsub.s32 %v132, %v134
    %v136 = vrot.slane %v91, %v135
    %vm137 = vcmask 261312
    %v138 = vsel %vm137, %v136, %v131
    %v139 = vlaneseq
    %v140 = vshrl.u32 %v139, 7
    %v141 = vsub.s32 %v113, %v140
    %v142 = vrot.slane %v94, %v141
    %v143 = vlaneseq
    %v144 = vshrl.u32 %v143, 7
    %v145 = vsub.s32 %v118, %v144
    %v146 = vrot.slane %v97, %v145
    %v147 = vsel %vm123, %v146, %v142
    %v148 = vlaneseq
    %v149 = vshrl.u32 %v148, 7
    %v150 = vsub.s32 %v125, %v149
    %v151 = vrot.slane %v100, %v150
    %v152 = vsel %vm130, %v151, %v147
    %v153 = vlaneseq
    %v154 = vshrl.u32 %v153, 7
    %v155 = vsub.s32 %v132, %v154
    %v156 = vrot.slane %v103, %v155
    %v157 = vsel %vm137, %v156, %v152
    %vm158 = vcmask 1041409
    %v159 = vsel %vm158, %v157, %v138
    %v161 = vadd.f32 %v79, %v159
    %vm162 = vcmask 254976
    %163 = vst.msk [vmem:[#allocation2] sm:$0x3] %vm162, %v161
    %v164 = vld [vmem:[#allocation3] sm:$0x3]
    %v165 = vmax.f32 %v63, %v64
    %166 = vmax.xlane.f32.xlu0 %v165
    %v167 = vpop.xlane.xlu0 %166
    %v168 = vmax.f32 %v65, %v66
    %169 = vmax.xlane.f32.xlu0 %v168
    %v170 = vpop.xlane.xlu0 %169
    %v171 = vmax.f32 %v67, %v68
    %172 = vmax.xlane.f32.xlu0 %v171
    %v173 = vpop.xlane.xlu0 %172
    %v174 = vmax.f32 %v69, %v70
    %175 = vmax.xlane.f32.xlu0 %v174
    %v176 = vpop.xlane.xlu0 %175
    %v177 = vmax.f32 %v71, %v72
    %178 = vmax.xlane.f32.xlu0 %v177
    %v179 = vpop.xlane.xlu0 %178
    %v180 = vmax.f32 %v73, %v74
    %181 = vmax.xlane.f32.xlu0 %v180
    %v182 = vpop.xlane.xlu0 %181
    %v183 = vmax.f32 %v75, %v76
    %184 = vmax.xlane.f32.xlu0 %v183
    %v185 = vpop.xlane.xlu0 %184
    %v186 = vmax.f32 %v77, %v78
    %187 = vmax.xlane.f32.xlu0 %v186
    %v188 = vpop.xlane.xlu0 %187
    %v197 = vlaneseq
    %v198 = vshrl.u32 %v197, 7
    %v199 = vsub.s32 %v113, %v198
    %v200 = vrot.slane %v167, %v199
    %v201 = vlaneseq
    %v202 = vshrl.u32 %v201, 7
    %v203 = vsub.s32 %v118, %v202
    %v204 = vrot.slane %v170, %v203
    %v205 = vsel %vm123, %v204, %v200
    %v206 = vlaneseq
    %v207 = vshrl.u32 %v206, 7
    %v208 = vsub.s32 %v125, %v207
    %v209 = vrot.slane %v173, %v208
    %v210 = vsel %vm130, %v209, %v205
    %v211 = vlaneseq
    %v212 = vshrl.u32 %v211, 7
    %v213 = vsub.s32 %v132, %v212
    %v214 = vrot.slane %v176, %v213
    %v215 = vsel %vm137, %v214, %v210
    %v216 = vlaneseq
    %v217 = vshrl.u32 %v216, 7
    %v218 = vsub.s32 %v113, %v217
    %v219 = vrot.slane %v179, %v218
    %v220 = vlaneseq
    %v221 = vshrl.u32 %v220, 7
    %v222 = vsub.s32 %v118, %v221
    %v223 = vrot.slane %v182, %v222
    %v224 = vsel %vm123, %v223, %v219
    %v225 = vlaneseq
    %v226 = vshrl.u32 %v225, 7
    %v227 = vsub.s32 %v125, %v226
    %v228 = vrot.slane %v185, %v227
    %v229 = vsel %vm130, %v228, %v224
    %v230 = vlaneseq
    %v231 = vshrl.u32 %v230, 7
    %v232 = vsub.s32 %v132, %v231
    %v233 = vrot.slane %v188, %v232
    %v234 = vsel %vm137, %v233, %v229
    %v235 = vsel %vm158, %v234, %v215
    %v237 = vmax.f32 %v164, %v235
    %238 = vst.msk [vmem:[#allocation3] sm:$0x3] %vm162, %v237
    // Predicated region
    $region30: #{tpu_custom_call.1} parent=1 // pred_check
      %p239 = pneg %p56
    $region31: #{tpu_custom_call.1} parent=1 // pred_check_branch
      %241 = sbr.rel (%p239) target = $region33
    $region32: #{tpu_custom_call.1} parent=1 // pred_region
      %v242 = vld [vmem:[#allocation7] sm:$0xff]
      %v243 = vld [vmem:[#allocation7 + $0x8] sm:$0xff]
      %v244 = vld [vmem:[#allocation7 + $0x10] sm:$0xff]
      %v245 = vld [vmem:[#allocation7 + $0x18] sm:$0xff]
      %v246 = vld [vmem:[#allocation9] sm:$0xff]
      %v247 = vld [vmem:[#allocation9 + $0x8] sm:$0xff]
      %v248 = vld [vmem:[#allocation9 + $0x10] sm:$0xff]
      %v249 = vld [vmem:[#allocation9 + $0x18] sm:$0xff]
      %v250 = vld [vmem:[#allocation9 + $0x20] sm:$0xff]
      %v251 = vld [vmem:[#allocation9 + $0x28] sm:$0xff]
      %v252 = vld [vmem:[#allocation9 + $0x30] sm:$0xff]
      %v253 = vld [vmem:[#allocation9 + $0x38] sm:$0xff]
      %v254 = vld [vmem:[#allocation9 + $0x40] sm:$0xff]
      %v255 = vld [vmem:[#allocation9 + $0x48] sm:$0xff]
      %v256 = vld [vmem:[#allocation9 + $0x50] sm:$0xff]
      %v257 = vld [vmem:[#allocation9 + $0x58] sm:$0xff]
      %v258 = vld [vmem:[#allocation9 + $0x60] sm:$0xff]
      %v259 = vld [vmem:[#allocation9 + $0x68] sm:$0xff]
      %v260 = vld [vmem:[#allocation9 + $0x70] sm:$0xff]
      %v261 = vld [vmem:[#allocation9 + $0x78] sm:$0xff]
      %v262 = vld [vmem:[#allocation2] sm:$0x3]
      %v263 = vmul.f32 %v262, 0.00390625
      %v264 = vld [vmem:[#allocation3] sm:$0x3]
      %v266 = vrot.slane %v264, 6
      %vm268 = vcmask 1041408
      %v269 = vsel %vm268, %v263, %v266
      %vm270 = vcmask 261120
      %v272 = vsel %vm270, %v269, 0
      %274 = vmatprep.subr.mxu0 0.0
      %275 = vmatpush1.msra.mxu0 %v242
      %276 = vmatprep.subr.mxu0 0.0
      %277 = vmatpush1.msra.mxu0 %v243
      %278 = vmatprep.subr.mxu0 0.0
      %279 = vmatpush1.msra.mxu0 %v244
      %280 = vmatprep.subr.mxu0 0.0
      %281 = vmatpush1.msra.mxu0 %v245
      %282 = vmatprep.subr.mxu0 0.0
      %283 = vmatpush1.msra.mxu0 0.0
      %284 = vmatprep.subr.mxu0 0.0
      %285 = vmatpush1.msra.mxu0 0.0
      %286 = vmatprep.subr.mxu0 0.0
      %287 = vmatpush1.msra.mxu0 0.0
      %288 = vmatprep.subr.mxu0 0.0
      %289 = vmatpush1.msra.mxu0 0.0
      %290 = vmatprep.subr.mxu0 0.0
      %291 = vmatpush1.msra.mxu0 0.0
      %292 = vmatprep.subr.mxu0 0.0
      %293 = vmatpush1.msra.mxu0 0.0
      %294 = vmatprep.subr.mxu0 0.0
      %295 = vmatpush1.msra.mxu0 0.0
      %296 = vmatprep.subr.mxu0 0.0
      %297 = vmatpush1.msra.mxu0 0.0
      %298 = vmatprep.subr.mxu0 0.0
      %299 = vmatpush1.msra.mxu0 0.0
      %300 = vmatprep.subr.mxu0 0.0
      %301 = vmatpush1.msra.mxu0 0.0
      %302 = vmatprep.subr.mxu0 0.0
      %303 = vmatpush1.msra.mxu0 0.0
      %304 = vmatprep.subr.mxu0 0.0
      %305 = vmatpush1.msra.mxu0 0.0
      %306 = vmatprep.subr.mxu0 0.0
      %307 = vmatpush1.msra.mxu0 0.0
      %308 = vmatprep.subr.mxu0 0.0
      %309 = vmatpush1.msra.mxu0 0.0
      %310 = vmatprep.subr.mxu0 0.0
      %311 = vmatpush1.msra.mxu0 0.0
      %312 = vmatprep.subr.mxu0 0.0
      %313 = vmatpush1.msra.mxu0 0.0
      %314 = vmatprep.subr.mxu0 0.0
      %315 = vmatpush1.msra.mxu0 0.0
      %316 = vmatprep.subr.mxu0 0.0
      %317 = vmatpush1.msra.mxu0 0.0
      %318 = vmatprep.subr.mxu0 0.0
      %319 = vmatpush1.msra.mxu0 0.0
      %320 = vmatprep.subr.mxu0 0.0
      %321 = vmatpush1.msra.mxu0 0.0
      %322 = vmatprep.subr.mxu0 0.0
      %323 = vmatpush1.msra.mxu0 0.0
      %324 = vmatprep.subr.mxu0 0.0
      %325 = vmatpush1.msra.mxu0 0.0
      %326 = vmatprep.subr.mxu0 0.0
      %327 = vmatpush1.msra.mxu0 0.0
      %328 = vmatprep.subr.mxu0 0.0
      %329 = vmatpush1.msra.mxu0 0.0
      %330 = vmatprep.subr.mxu0 0.0
      %331 = vmatpush1.msra.mxu0 0.0
      %332 = vmatprep.subr.mxu0 0.0
      %333 = vmatpush1.msra.mxu0 0.0
      %334 = vmatprep.subr.mxu0 0.0
      %335 = vmatpush1.msra.mxu0 0.0
      %336 = vmatprep.subr.mxu0 0.0
      %337 = vmatpush1.msra.mxu0 0.0
      %338 = vmatprep.mubr.f32.mxu0 0.0
      %339 = vmatmul.mubr.f32.gmra.mrb[0].mxu0 %v272
      %v340 = vpop.f32.mrb[0].mxu0
      %v341 = vadd.f32 0.0, %v340
      %v342 = vpop.f32.mrb[0].mxu0
      %343 = vdwg.mxu0
      %v344 = vmax.f32 %v341, 0.0
      %345 = vmatprep.subr.mxu0 0.0
      %346 = vmatpush1.msra.mxu0 %v246
      %347 = vmatprep.subr.mxu0 0.0
      %348 = vmatpush1.msra.mxu0 %v247
      %349 = vmatprep.subr.mxu0 0.0
      %350 = vmatpush1.msra.mxu0 %v248
      %351 = vmatprep.subr.mxu0 0.0
      %352 = vmatpush1.msra.mxu0 %v249
      %353 = vmatprep.subr.mxu0 0.0
      %354 = vmatpush1.msra.mxu0 %v250
      %355 = vmatprep.subr.mxu0 0.0
      %356 = vmatpush1.msra.mxu0 %v251
      %357 = vmatprep.subr.mxu0 0.0
      %358 = vmatpush1.msra.mxu0 %v252
      %359 = vmatprep.subr.mxu0 0.0
      %360 = vmatpush1.msra.mxu0 %v253
      %361 = vmatprep.subr.mxu0 0.0
      %362 = vmatpush1.msra.mxu0 %v254
      %363 = vmatprep.subr.mxu0 0.0
      %364 = vmatpush1.msra.mxu0 %v255
      %365 = vmatprep.subr.mxu0 0.0
      %366 = vmatpush1.msra.mxu0 %v256
      %367 = vmatprep.subr.mxu0 0.0
      %368 = vmatpush1.msra.mxu0 %v257
      %369 = vmatprep.subr.mxu0 0.0
      %370 = vmatpush1.msra.mxu0 %v258
      %371 = vmatprep.subr.mxu0 0.0
      %372 = vmatpush1.msra.mxu0 %v259
      %373 = vmatprep.subr.mxu0 0.0
      %374 = vmatpush1.msra.mxu0 %v260
      %375 = vmatprep.subr.mxu0 0.0
      %376 = vmatpush1.msra.mxu0 %v261
      %377 = vmatprep.subr.mxu0 0.0
      %378 = vmatpush1.msra.mxu0 0.0
      %379 = vmatprep.subr.mxu0 0.0
      %380 = vmatpush1.msra.mxu0 0.0
      %381 = vmatprep.subr.mxu0 0.0
      %382 = vmatpush1.msra.mxu0 0.0
      %383 = vmatprep.subr.mxu0 0.0
      %384 = vmatpush1.msra.mxu0 0.0
      %385 = vmatprep.subr.mxu0 0.0
      %386 = vmatpush1.msra.mxu0 0.0
      %387 = vmatprep.subr.mxu0 0.0
      %388 = vmatpush1.msra.mxu0 0.0
      %389 = vmatprep.subr.mxu0 0.0
      %390 = vmatpush1.msra.mxu0 0.0
      %391 = vmatprep.subr.mxu0 0.0
      %392 = vmatpush1.msra.mxu0 0.0
      %393 = vmatprep.subr.mxu0 0.0
      %394 = vmatpush1.msra.mxu0 0.0
      %395 = vmatprep.subr.mxu0 0.0
      %396 = vmatpush1.msra.mxu0 0.0
      %397 = vmatprep.subr.mxu0 0.0
      %398 = vmatpush1.msra.mxu0 0.0
      %399 = vmatprep.subr.mxu0 0.0
      %400 = vmatpush1.msra.mxu0 0.0
      %401 = vmatprep.subr.mxu0 0.0
      %402 = vmatpush1.msra.mxu0 0.0
      %403 = vmatprep.subr.mxu0 0.0
      %404 = vmatpush1.msra.mxu0 0.0
      %405 = vmatprep.subr.mxu0 0.0
      %406 = vmatpush1.msra.mxu0 0.0
      %407 = vmatprep.subr.mxu0 0.0
      %408 = vmatpush1.msra.mxu0 0.0
      %409 = vmatprep.mubr.f32.mxu0 0.0
      %410 = vmatmul.mubr.f32.gmra.mrb[0].mxu0 %v344
      %v411 = vpop.f32.mrb[0].mxu0
      %v412 = vadd.f32 0.0, %v411
      %v413 = vpop.f32.mrb[0].mxu0
      %414 = vdwg.mxu0
      %v416 = vrot.slane %v412, 2
      %v418 = vadd.f32 %v412, %v416
      %v419 = vxor.u32 %v418, 2147483648
      %v420 = vmul.f32 %v419, 1.442695
      %v421 = vpow.pop %v420
      %v422 = vadd.f32 %v421, 1.0
      %v423 = vrcp.pop %v422
      %v424 = vmul.f32 1.0, %v423
      %425 = vst [vmem:[#allocation10] sm:$0x3] %v424
    $region33: #{tpu_custom_call.1} parent=1 // pred_fallthru
      _
    // Predicated region
    $region34: #{tpu_custom_call.1} parent=1 // pred_check
      _
    $region35: #{tpu_custom_call.1} parent=1 // pred_check_branch
      %427 = sbr.rel (0) target = $region37
    $region36: #{tpu_custom_call.1} parent=1 // pred_region
      %s429 = ssub.s32 32, 32
      %430 = vsyncadd [#allocation6], %s429
      %s432 = sshll.u32 [#allocation10], 4
      %s433 = int_to_ptr.vmem [resolvable:$true] %s432
      %435 = dma.vmem_to_hbm [thread:$0]  %s433, 32, %s3, [#allocation6]
    $region37: #{tpu_custom_call.1} parent=1 // pred_fallthru
      _
    // Predicated region
    $region38: #{tpu_custom_call.1} parent=1 // pred_check
      _
    $region39: #{tpu_custom_call.1} parent=1 // pred_check_branch
      %437 = sbr.rel (0) target = $region41
    $region40: #{tpu_custom_call.1} parent=1 // pred_region
      %438 = dma.done [#allocation6], 32
    $region41: #{tpu_custom_call.1} parent=1 // pred_fallthru
      _
    %439 = vsyncpa [#allocation5], 1
    %440 = vsyncpa [#allocation8], 1
    %441 = vsyncpa [#allocation6], 1

</llo_original>
